<compile_context>
chip_gen: v5e
topology: v5e:2x2
jax: 0.10.0
libtpu: 0.0.40
codegen_flags: <defaults>
</compile_context>

<pallas_src>
import functools

import jax
import jax.numpy as jnp
from jax.experimental import pallas as pl
from jax.experimental.pallas import tpu as pltpu


def _round_up(x, m):
    return ((x + m - 1) // m) * m


def _ce_label_smooth_kernel(logits_ref, xlabel_ref, loss_ref,
                            m_sc, s_sc, rs_sc,
                            *, epsilon, num_classes, class_tile, mask_classes):
    """Processes one (batch_tile, class_tile) block.

    Grid = (batch_tiles ["parallel"], class_tiles ["arbitrary"]).  Online
    (flash-softmax style) log-sum-exp + raw row-sum accumulate in (tb, 1) f32
    scratch; elementwise ops stay in the input dtype.

        loss_i = LSE_i - (1 - eps) * x[i, label_i] - (eps / C) * sum_j x[i, j]
    """
    j = pl.program_id(1)

    @pl.when(j == 0)
    def _init():
        m_sc[...] = jnp.full(m_sc.shape, -jnp.inf, jnp.float32)
        s_sc[...] = jnp.zeros(s_sc.shape, jnp.float32)
        rs_sc[...] = jnp.zeros(rs_sc.shape, jnp.float32)

    x = logits_ref[...]                                      # (tb, tc), input dtype

    if mask_classes:
        # Only taken when the class axis is split and C % class_tile != 0:
        # mask out-of-range columns of the ragged last class tile.
        col = jax.lax.broadcasted_iota(jnp.int32, x.shape, 1) + j * class_tile
        valid = col < num_classes
        x_max_in = jnp.where(valid, x, jnp.asarray(-jnp.inf, dtype=x.dtype))
        x_sum_in = jnp.where(valid, x, jnp.zeros((), dtype=x.dtype))
    else:
        x_max_in = x
        x_sum_in = x

    # Raw row-sum (f32 accumulation) for the uniform eps/C term.
    rs_sc[...] += jnp.sum(x_sum_in, axis=1, keepdims=True, dtype=jnp.float32)

    # Online max / exp-sum (exact when there is a single class tile).
    blk_max = jnp.max(x_max_in, axis=1, keepdims=True).astype(jnp.float32)
    m_prev = m_sc[...]
    m_new = jnp.maximum(m_prev, blk_max)
    shifted = x_max_in - m_new.astype(x.dtype)               # stays in input dtype
    p_sum = jnp.sum(jnp.exp(shifted), axis=1, keepdims=True, dtype=jnp.float32)
    s_sc[...] = s_sc[...] * jnp.exp(m_prev - m_new) + p_sum
    m_sc[...] = m_new

    @pl.when(j == pl.num_programs(1) - 1)
    def _finalize():
        lse = m_sc[...] + jnp.log(s_sc[...])                 # full log-sum-exp
        loss = (lse
                - (1.0 - epsilon) * xlabel_ref[...]
                - (epsilon / num_classes) * rs_sc[...])
        loss_ref[...] = loss


def _choose_tiles(batch, num_classes, itemsize, sublane):
    """Pick (batch_tile, class_tile) from the full in-kernel footprint.

    Footprint per streamed logit element ~= double-buffered input bytes plus
    in-kernel temporaries (shifted / exp / f32 conversions).  Budgeted to fit
    v7x's 64 MiB physical VMEM with headroom; v5e/v6e simply get extra slack.
    """
    budget = 40 * 1024 * 1024
    per_elem = 2 * itemsize + 16

    max_rows_full_c = budget // (per_elem * num_classes)
    half = _round_up(pl.cdiv(batch, 2), sublane)             # >=2 tiles for megacore
    if max_rows_full_c >= sublane:
        # Whole class axis resident: single class tile, tile only the batch.
        tc = num_classes
        tb = min(max_rows_full_c, 8192, max(half, sublane))
        tb = max(sublane, (tb // sublane) * sublane)
    else:
        # Vocab-scale classes: flash-style split of the class axis.
        tb = max(sublane, (min(half, 512) // sublane) * sublane)
        tc = (budget // (per_elem * tb)) // 128 * 128
        tc = max(128, min(tc, _round_up(num_classes, 128)))
    return tb, tc


def cross_entropy_label_smooth(logits, targets, *, epsilon=0.1, keep_dim=False,
                               batch_tile=None, class_tile=None):
    """logits: (B, C) float (f32 or bf16); targets: (B,) int class indices in [0, C)."""
    B, C = logits.shape
    targets = targets.astype(jnp.int32)

    # Tiny XLA gather (B elements) -> the kernel never extracts labels per-element.
    x_label = jnp.take_along_axis(logits, targets[:, None], axis=1).astype(jnp.float32)

    itemsize = jnp.dtype(logits.dtype).itemsize
    sublane = max(8, 32 // itemsize)                          # f32 -> 8, bf16 -> 16
    tb, tc = _choose_tiles(B, C, itemsize, sublane)
    if batch_tile is not None:
        tb = int(batch_tile)
    if class_tile is not None:
        tc = int(class_tile)

    n_b = pl.cdiv(B, tb)                                      # ragged last batch tile OK
    n_c = pl.cdiv(C, tc)
    mask_classes = (C % tc) != 0                              # ragged last class tile

    # VMEM scoped limit follows the same footprint formula as the tile choice.
    fp_bytes = (2 * itemsize + 16) * tb * tc + 64 * tb
    vmem_limit = int(min(48 * 1024 * 1024,
                         max(32 * 1024 * 1024, fp_bytes + (4 << 20))))

    cost = pl.CostEstimate(
        flops=int(5 * B * C),
        transcendentals=int(B * C),
        bytes_accessed=int(B * C * itemsize + 3 * B * 4),
    )

    kernel = functools.partial(
        _ce_label_smooth_kernel,
        epsilon=float(epsilon),
        num_classes=int(C),
        class_tile=int(tc),
        mask_classes=bool(mask_classes),
    )

    per_sample = pl.pallas_call(
        kernel,
        out_shape=jax.ShapeDtypeStruct((B, 1), jnp.float32),
        grid_spec=pltpu.PrefetchScalarGridSpec(
            num_scalar_prefetch=0,
            grid=(n_b, n_c),
            in_specs=[
                pl.BlockSpec((tb, tc), lambda i, j: (i, j)),   # logits stream
                pl.BlockSpec((tb, 1), lambda i, j: (i, 0)),    # gathered label logits
            ],
            out_specs=pl.BlockSpec((tb, 1), lambda i, j: (i, 0)),
            scratch_shapes=[pltpu.VMEM((tb, 1), jnp.float32),  # running max
                            pltpu.VMEM((tb, 1), jnp.float32),  # running exp-sum
                            pltpu.VMEM((tb, 1), jnp.float32)], # running row-sum
        ),
        compiler_params=pltpu.CompilerParams(
            dimension_semantics=("parallel", "arbitrary"),
            vmem_limit_bytes=vmem_limit,
        ),
        cost_estimate=cost,
    )(logits, x_label)

    per_sample = per_sample[:, 0]                              # (B,)
    if keep_dim:
        return per_sample                                      # == (-t*logp).sum(1)
    return jnp.mean(per_sample)                                # == (-t*logp).mean(0).sum()


def _reference(logits, targets, epsilon=0.1, keep_dim=False):
    log_probs = jax.nn.log_softmax(logits.astype(jnp.float32), axis=1)
    C = logits.shape[1]
    one_hot = jax.nn.one_hot(targets, C, dtype=jnp.float32)
    smooth = (1.0 - epsilon) * one_hot + epsilon / C
    if keep_dim:
        return jnp.sum(-smooth * log_probs, axis=1)
    return jnp.sum(jnp.mean(-smooth * log_probs, axis=0))


if __name__ == "__main__":
    key = jax.random.PRNGKey(0)
    ks = jax.random.split(key, 8)

    def check(logits, targets, eps=0.1, atol=1e-5, rtol=1e-5, **kw):
        got_mean = jax.block_until_ready(
            cross_entropy_label_smooth(logits, targets, epsilon=eps, keep_dim=False, **kw))
        got_keep = jax.block_until_ready(
            cross_entropy_label_smooth(logits, targets, epsilon=eps, keep_dim=True, **kw))
        want_mean = _reference(logits, targets, eps, False)
        want_keep = _reference(logits, targets, eps, True)
        assert jnp.allclose(got_mean, want_mean, atol=atol, rtol=rtol), (got_mean, want_mean)
        assert jnp.allclose(got_keep, want_keep, atol=atol, rtol=rtol), (got_keep, want_keep)

    # 1) Aligned batch, single class tile (common path).
    B, C = 8, 128
    logits = jax.random.normal(ks[0], (B, C), dtype=jnp.float32)
    targets = jax.random.randint(ks[1], (B,), 0, C, dtype=jnp.int32)
    check(logits, targets)

    # 2) Ragged batch (no jnp.pad of the logits; tail rows handled by OOB masking).
    B2 = 10
    logits2 = jax.random.normal(ks[2], (B2, C), dtype=jnp.float32)
    targets2 = jax.random.randint(ks[3], (B2,), 0, C, dtype=jnp.int32)
    check(logits2, targets2)

    # 3) Forced class-axis split (flash-style online LSE) with a ragged,
    #    in-kernel-masked last class tile (C not a multiple of the class tile).
    C3 = 200
    logits3 = jax.random.normal(ks[4], (8, C3), dtype=jnp.float32)
    targets3 = jax.random.randint(ks[5], (8,), 0, C3, dtype=jnp.int32)
    check(logits3, targets3, class_tile=128, atol=1e-4, rtol=1e-4)

    # 4) bf16 logits stay bf16 over HBM and for in-kernel elementwise work.
    B4, C4 = 16, 128
    logits4 = jax.random.normal(ks[6], (B4, C4), dtype=jnp.float32).astype(jnp.bfloat16)
    targets4 = jax.random.randint(ks[7], (B4,), 0, C4, dtype=jnp.int32)
    check(logits4, targets4, atol=3e-2, rtol=3e-2)

    print("KERNEL_OK")
</pallas_src>

<mosaic_0001>
module attributes {stable_mosaic.version = 11 : i64} {
  func.func @_ce_label_smooth_kernel(%arg0: i32, %arg1: i32, %arg2: memref<8x128xf32, #tpu.memory_space<vmem>>, %arg3: memref<8x1xf32, #tpu.memory_space<vmem>>, %arg4: memref<8x1xf32, #tpu.memory_space<vmem>>, %arg5: memref<8x1xf32, #tpu.memory_space<vmem>>, %arg6: memref<8x1xf32, #tpu.memory_space<vmem>>, %arg7: memref<8x1xf32, #tpu.memory_space<vmem>>) attributes {dimension_semantics = [#tpu.dimension_semantics<parallel>, #tpu.dimension_semantics<arbitrary>], iteration_bounds = array<i64: 1, 1>, scalar_prefetch = 0 : i64, scratch_operands = 3 : i64, tpu.core_type = #tpu.core_type<tc>, window_params = [{transform_indices = @transform_0, window_bounds = array<i64: 8, 128>}, {transform_indices = @transform_1, window_bounds = array<i64: 8, 1>}, {transform_indices = @transform_2, window_bounds = array<i64: 8, 1>}]} {
    %c0_i32 = arith.constant 0 : i32
    %0 = arith.cmpi eq, %arg1, %c0_i32 : i32
    %1 = arith.extui %0 : i1 to i32
    %c0_i32_0 = arith.constant 0 : i32
    %2 = arith.cmpi ne, %1, %c0_i32_0 : i32
    scf.if %2 {
      %cst_18 = arith.constant 0xFF800000 : f32
      %28 = vector.broadcast %cst_18 : f32 to vector<8x1xf32>
      %c0_19 = arith.constant 0 : index
      %c0_20 = arith.constant 0 : index
      %29 = vector.load %arg5[%c0_19, %c0_20] : memref<8x1xf32, #tpu.memory_space<vmem>>, vector<8x1xf32>
      tpu.vector_store %arg5[%c0_19, %c0_20], %28 {strides = array<i32>} : memref<8x1xf32, #tpu.memory_space<vmem>>, vector<8x1xf32>,
      %cst_21 = arith.constant 0.000000e+00 : f32
      %30 = vector.broadcast %cst_21 : f32 to vector<8x1xf32>
      %c0_22 = arith.constant 0 : index
      %c0_23 = arith.constant 0 : index
      %31 = vector.load %arg6[%c0_22, %c0_23] : memref<8x1xf32, #tpu.memory_space<vmem>>, vector<8x1xf32>
      tpu.vector_store %arg6[%c0_22, %c0_23], %30 {strides = array<i32>} : memref<8x1xf32, #tpu.memory_space<vmem>>, vector<8x1xf32>,
      %cst_24 = arith.constant 0.000000e+00 : f32
      %32 = vector.broadcast %cst_24 : f32 to vector<8x1xf32>
      %c0_25 = arith.constant 0 : index
      %c0_26 = arith.constant 0 : index
      %33 = vector.load %arg7[%c0_25, %c0_26] : memref<8x1xf32, #tpu.memory_space<vmem>>, vector<8x1xf32>
      tpu.vector_store %arg7[%c0_25, %c0_26], %32 {strides = array<i32>} : memref<8x1xf32, #tpu.memory_space<vmem>>, vector<8x1xf32>,
    } else {
    }
    %c0 = arith.constant 0 : index
    %c0_1 = arith.constant 0 : index
    %3 = vector.load %arg2[%c0, %c0_1] : memref<8x128xf32, #tpu.memory_space<vmem>>, vector<8x128xf32>
    %c0_2 = arith.constant 0 : index
    %c0_3 = arith.constant 0 : index
    %4 = vector.load %arg7[%c0_2, %c0_3] : memref<8x1xf32, #tpu.memory_space<vmem>>, vector<8x1xf32>
    %cst = arith.constant dense<0.000000e+00> : vector<8xf32>
    %5 = vector.multi_reduction <add>, %3, %cst [1] : vector<8x128xf32> to vector<8xf32>
    %6 = vector.shape_cast %5 : vector<8xf32> to vector<8x1xf32>
    %7 = arith.addf %4, %6 : vector<8x1xf32>
    %c0_4 = arith.constant 0 : index
    %c0_5 = arith.constant 0 : index
    %8 = vector.load %arg7[%c0_4, %c0_5] : memref<8x1xf32, #tpu.memory_space<vmem>>, vector<8x1xf32>
    tpu.vector_store %arg7[%c0_4, %c0_5], %7 {strides = array<i32>} : memref<8x1xf32, #tpu.memory_space<vmem>>, vector<8x1xf32>,
    %cst_6 = arith.constant dense<0xFF800000> : vector<8xf32>
    %9 = vector.multi_reduction <maximumf>, %3, %cst_6 [1] : vector<8x128xf32> to vector<8xf32>
    %10 = vector.shape_cast %9 : vector<8xf32> to vector<8x1xf32>
    %c0_7 = arith.constant 0 : index
    %c0_8 = arith.constant 0 : index
    %11 = vector.load %arg5[%c0_7, %c0_8] : memref<8x1xf32, #tpu.memory_space<vmem>>, vector<8x1xf32>
    %12 = arith.maximumf %11, %10 : vector<8x1xf32>
    %13 = vector.broadcast %12 : vector<8x1xf32> to vector<8x128xf32>
    %14 = arith.subf %3, %13 : vector<8x128xf32>
    %15 = math.exp %14 : vector<8x128xf32>
    %cst_9 = arith.constant dense<0.000000e+00> : vector<8xf32>
    %16 = vector.multi_reduction <add>, %15, %cst_9 [1] : vector<8x128xf32> to vector<8xf32>
    %17 = vector.shape_cast %16 : vector<8xf32> to vector<8x1xf32>
    %c0_10 = arith.constant 0 : index
    %c0_11 = arith.constant 0 : index
    %18 = vector.load %arg6[%c0_10, %c0_11] : memref<8x1xf32, #tpu.memory_space<vmem>>, vector<8x1xf32>
    %19 = arith.subf %11, %12 : vector<8x1xf32>
    %20 = math.exp %19 : vector<8x1xf32>
    %21 = arith.mulf %18, %20 : vector<8x1xf32>
    %22 = arith.addf %21, %17 : vector<8x1xf32>
    %c0_12 = arith.constant 0 : index
    %c0_13 = arith.constant 0 : index
    %23 = vector.load %arg6[%c0_12, %c0_13] : memref<8x1xf32, #tpu.memory_space<vmem>>, vector<8x1xf32>
    tpu.vector_store %arg6[%c0_12, %c0_13], %22 {strides = array<i32>} : memref<8x1xf32, #tpu.memory_space<vmem>>, vector<8x1xf32>,
    %c0_14 = arith.constant 0 : index
    %c0_15 = arith.constant 0 : index
    %24 = vector.load %arg5[%c0_14, %c0_15] : memref<8x1xf32, #tpu.memory_space<vmem>>, vector<8x1xf32>
    tpu.vector_store %arg5[%c0_14, %c0_15], %12 {strides = array<i32>} : memref<8x1xf32, #tpu.memory_space<vmem>>, vector<8x1xf32>,
    %c0_i32_16 = arith.constant 0 : i32
    %25 = arith.cmpi eq, %arg1, %c0_i32_16 : i32
    %26 = arith.extui %25 : i1 to i32
    %c0_i32_17 = arith.constant 0 : i32
    %27 = arith.cmpi ne, %26, %c0_i32_17 : i32
    scf.if %27 {
      %c0_18 = arith.constant 0 : index
      %c0_19 = arith.constant 0 : index
      %28 = vector.load %arg5[%c0_18, %c0_19] : memref<8x1xf32, #tpu.memory_space<vmem>>, vector<8x1xf32>
      %c0_20 = arith.constant 0 : index
      %c0_21 = arith.constant 0 : index
      %29 = vector.load %arg6[%c0_20, %c0_21] : memref<8x1xf32, #tpu.memory_space<vmem>>, vector<8x1xf32>
      %30 = math.log %29 : vector<8x1xf32>
      %31 = arith.addf %28, %30 : vector<8x1xf32>
      %c0_22 = arith.constant 0 : index
      %c0_23 = arith.constant 0 : index
      %32 = vector.load %arg3[%c0_22, %c0_23] : memref<8x1xf32, #tpu.memory_space<vmem>>, vector<8x1xf32>
      %cst_24 = arith.constant 0.899999976 : f32
      %33 = vector.broadcast %cst_24 : f32 to vector<8x1xf32>
      %34 = arith.mulf %33, %32 : vector<8x1xf32>
      %35 = arith.subf %31, %34 : vector<8x1xf32>
      %c0_25 = arith.constant 0 : index
      %c0_26 = arith.constant 0 : index
      %36 = vector.load %arg7[%c0_25, %c0_26] : memref<8x1xf32, #tpu.memory_space<vmem>>, vector<8x1xf32>
      %cst_27 = arith.constant 7.812500e-04 : f32
      %37 = vector.broadcast %cst_27 : f32 to vector<8x1xf32>
      %38 = arith.mulf %37, %36 : vector<8x1xf32>
      %39 = arith.subf %35, %38 : vector<8x1xf32>
      %c0_28 = arith.constant 0 : index
      %c0_29 = arith.constant 0 : index
      %40 = vector.load %arg4[%c0_28, %c0_29] : memref<8x1xf32, #tpu.memory_space<vmem>>, vector<8x1xf32>
      tpu.vector_store %arg4[%c0_28, %c0_29], %39 {strides = array<i32>} : memref<8x1xf32, #tpu.memory_space<vmem>>, vector<8x1xf32>,
    } else {
    }
    return
  }
  func.func @transform_0(%arg0: i32, %arg1: i32) -> (i32, i32) {
    %c0_i32 = arith.constant 0 : i32
    return %arg0, %arg1 : i32, i32
  }
  func.func @transform_1(%arg0: i32, %arg1: i32) -> (i32, i32) {
    %c0_i32 = arith.constant 0 : i32
    %c0_i32_0 = arith.constant 0 : i32
    return %arg0, %c0_i32 : i32, i32
  }
  func.func @transform_2(%arg0: i32, %arg1: i32) -> (i32, i32) {
    %c0_i32 = arith.constant 0 : i32
    %c0_i32_0 = arith.constant 0 : i32
    return %arg0, %c0_i32 : i32, i32
  }
}

</mosaic_0001>

<llo_original>
// kernel: tpu_custom_call.1
$region0: #{tpu_custom_call.1}
  #allocation0 [shape = 'u32[]', space=smem, size = 0x4, offset = 0x4, fixed_abs, tag = 'smem constant byte address 0x4 - core index']
  #allocation1 [shape = 'u32[72,128]{1,0:T(1,128)}', space=vmem, size = 0x9000, scoped, tag = 'internal scratch']
  #allocation2 [shape = 'f32[8,1]{1,0:T(8,128)}', space=vmem, size = 0x1000, scoped, tag = 'scratch operand']
  #allocation3 [shape = 'f32[8,1]{1,0:T(8,128)}', space=vmem, size = 0x1000, scoped, tag = 'scratch operand']
  #allocation4 [shape = 'f32[8,1]{1,0:T(8,128)}', space=vmem, size = 0x1000, scoped, tag = 'scratch operand']
  %s0 = inlined_call_operand.vmem [shape: f32[8,128], index: 0, kind: input, shape index: {}]
  %s1 = inlined_call_operand.vmem [shape: f32[8,1], index: 1, kind: input, shape index: {}]
  %s2 = inlined_call_operand.vmem [shape: f32[8,1], index: 2, kind: output, shape index: {}]
  %s3 = sld [smem:[#allocation0]]
  $region26: #{tpu_custom_call.1} parent=0
    _
  %s5 = ssub.s32 1, %s3
  %s6 = scalar_select 0, %s5, %s3
  // Predicated region
  $region2: #{tpu_custom_call.1} parent=0 // pred_check
    _
  $region3: #{tpu_custom_call.1} parent=0 // pred_check_branch
    %8 = sbr.rel (0) target = $region5
  $region4: #{tpu_custom_call.1} parent=0 // pred_region
    _
  $region5: #{tpu_custom_call.1} parent=0 // pred_fallthru
    _
  // Predicated region
  $region6: #{tpu_custom_call.1} parent=0 // pred_check
    _
  $region7: #{tpu_custom_call.1} parent=0 // pred_check_branch
    %10 = sbr.rel (0) target = $region9
  $region8: #{tpu_custom_call.1} parent=0 // pred_region
    _
  $region9: #{tpu_custom_call.1} parent=0 // pred_fallthru
    _
  %p11 = scmp.eq.s32.totalorder 0, 0
  // Predicated region
  $region10: #{tpu_custom_call.1} parent=0 // pred_check
    %p12 = pneg %p11
  $region11: #{tpu_custom_call.1} parent=0 // pred_check_branch
    %14 = sbr.rel (%p12) target = $region13
  $region12: #{tpu_custom_call.1} parent=0 // pred_region
    %vm15 = vcmask 7168
    %16 = vst.msk [vmem:[#allocation2] sm:$0xff] %vm15, -inf
    %17 = vst.msk [vmem:[#allocation3] sm:$0xff] %vm15, 0.0
    %18 = vst.msk [vmem:[#allocation4] sm:$0xff] %vm15, 0.0
  $region13: #{tpu_custom_call.1} parent=0 // pred_fallthru
    _
  %v19 = vld [vmem:[%s0] sm:$0xff]
  %v20 = vld [vmem:[#allocation4] sm:$0xff]
  %21 = vadd.xlane.f32.xlu0 %v19
  %v22 = vpop.xlane.xlu0 %21
  %v23 = vadd.f32 %v20, %v22
  %vm24 = vcmask 7168
  %25 = vst.msk [vmem:[#allocation4] sm:$0xff] %vm24, %v23
  %26 = vmax.xlane.f32.xlu0 %v19
  %v27 = vpop.xlane.xlu0 %26
  %v28 = vld [vmem:[#allocation2] sm:$0xff]
  %v29 = vmax.f32 %v28, %v27
  %31 = vset.pattern.permute.xlu0 0
  %32 = vperm.xlu0 %31, %v29
  %v33 = vpop.permute.xlu0 %32
  %v35 = vsub.f32 %v19, %v33
  %v36 = vmul.f32 %v35, 1.442695
  %v37 = vpow.pop %v36
  %38 = vadd.xlane.f32.xlu0 %v37
  %v39 = vpop.xlane.xlu0 %38
  %v40 = vld [vmem:[#allocation3] sm:$0xff]
  %v41 = vsub.f32 %v28, %v29
  %v42 = vmul.f32 %v41, 1.442695
  %v43 = vpow.pop %v42
  %v44 = vmul.f32 %v40, %v43
  %v45 = vadd.f32 %v44, %v39
  %46 = vst.msk [vmem:[#allocation3] sm:$0xff] %vm24, %v45
  %47 = vst.msk [vmem:[#allocation2] sm:$0xff] %vm24, %v29
  // Predicated region
  $region14: #{tpu_custom_call.1} parent=0 // pred_check
    %p48 = pneg %p11
  $region15: #{tpu_custom_call.1} parent=0 // pred_check_branch
    %50 = sbr.rel (%p48) target = $region17
  $region16: #{tpu_custom_call.1} parent=0 // pred_region
    %v51 = vld [vmem:[#allocation2] sm:$0xff]
    %v52 = vld [vmem:[#allocation3] sm:$0xff]
    %v53 = vlog2.pop %v52
    %v54 = vmul.f32 %v53, 0.6931472
    %v55 = vadd.f32 %v51, %v54
    %v56 = vld [vmem:[%s1] sm:$0xff]
    %v57 = vmul.f32 %v56, 0.9
    %v58 = vsub.f32 %v55, %v57
    %v59 = vld [vmem:[#allocation4] sm:$0xff]
    %v60 = vmul.f32 %v59, 0.00078125
    %v61 = vsub.f32 %v58, %v60
    %62 = vst.msk [vmem:[%s2] sm:$0xff] %vm24, %v61
  $region17: #{tpu_custom_call.1} parent=0 // pred_fallthru
    _
  // Predicated region
  $region18: #{tpu_custom_call.1} parent=0 // pred_check
    _
  $region19: #{tpu_custom_call.1} parent=0 // pred_check_branch
    %64 = sbr.rel (0) target = $region21
  $region20: #{tpu_custom_call.1} parent=0 // pred_region
    _
  $region21: #{tpu_custom_call.1} parent=0 // pred_fallthru
    _
  // Predicated region
  $region22: #{tpu_custom_call.1} parent=0 // pred_check
    _
  $region23: #{tpu_custom_call.1} parent=0 // pred_check_branch
    %66 = sbr.rel (0) target = $region25
  $region24: #{tpu_custom_call.1} parent=0 // pred_region
    _
  $region25: #{tpu_custom_call.1} parent=0 // pred_fallthru
    _

</llo_original>
